<compile_context>
chip_gen: v6e
topology: v6e:2x2x1
jax: 0.10.0
libtpu: 0.0.40
codegen_flags: <defaults>
</compile_context>

<pallas_src>
import functools

import jax
import jax.numpy as jnp
from jax.experimental import pallas as pl
from jax.experimental.pallas import tpu as pltpu


def _round_up(v, m):
    return ((v + m - 1) // m) * m


def _vmem_capacity_bytes():
    """Physical per-core VMEM; fall back to 64 MiB (v7x, smallest) if unknown."""
    try:
        return int(pltpu.get_tpu_info().vmem_capacity_bytes)
    except Exception:
        return 64 << 20


def _make_tap_masks(H, W):
    """(9, H*W) f32 validity masks for the 3x3 taps of a pad=1 convolution.

    masks[(dy+1)*3 + (dx+1), y*W + x] == 1 iff (y+dy, x+dx) lies inside the
    image.  Built once per DenseBlock call, kept VMEM-resident across the grid.
    """
    yy, xx = jnp.meshgrid(jnp.arange(H), jnp.arange(W), indexing="ij")
    yy = yy.reshape(-1)
    xx = xx.reshape(-1)
    rows = []
    for dy in (-1, 0, 1):
        for dx in (-1, 0, 1):
            ok = ((yy + dy >= 0) & (yy + dy <= H - 1) &
                  (xx + dx >= 0) & (xx + dx <= W - 1))
            rows.append(ok)
    return jnp.stack(rows, axis=0).astype(jnp.float32)


def _bn_relu_conv3x3_kernel(x_ref, scale_ref, shift_ref, w2d_ref, b_ref,
                            masks_ref, out_ref, sum_ref, ssq_ref, stack_ref,
                            *, H, W):
    """Fused BN(affine) -> ReLU -> Conv3x3(pad=1) -> dense concat, one image.

    Layout: channels on sublanes, flattened H*W spatial on lanes (lane-dense).

    x_ref     : (1, Cin, HW)        this layer's dense-block state
    scale_ref : (Cin, 1)            gamma * rsqrt(var + eps)   (batch stats folded)
    shift_ref : (Cin, 1)            beta - mean * scale
    w2d_ref   : (Cout, 9*Cin)       conv weight, columns tap-major ((dy*3+dx)*Cin + c)
    b_ref     : (Cout, 1)           conv bias
    masks_ref : (9, HW)             per-tap border-validity masks (resident)
    out_ref   : (1, Cin+Cout, HW)   [ x | conv_block(x) ]  (fused dense concat)
    sum_ref   : (1, Cout, 1)        per-image sum of new channels   (next BN)
    ssq_ref   : (1, Cout, 1)        per-image sum of squares        (next BN)
    stack_ref : (9*Cin, HW)         VMEM scratch: stacked im2col operand
    """
    Cin = x_ref.shape[1]
    HW = H * W

    x = x_ref[0]                                              # (Cin, HW)

    # ---- BatchNorm affine (stats precomputed by wrapper) + ReLU ----
    a = jnp.maximum(x * scale_ref[...] + shift_ref[...], 0.0)

    # ---- im2col: 9 lane rotations of `a` (XLU), masked at the image border,
    #      written tap-major into the stacked operand row bands. ----
    for dy in range(3):
        for dx in range(3):
            t = dy * 3 + dx
            s = (dy - 1) * W + (dx - 1)        # flat lane offset of this tap
            if s == 0:
                tap = a                        # centre tap: always valid
            else:
                tap = pltpu.roll(a, (-s) % HW, 1) * masks_ref[t:t + 1, :]
            stack_ref[t * Cin:(t + 1) * Cin, :] = tap

    # ---- single K = 9*Cin MXU matmul, f32 accumulation ----
    y = jnp.dot(w2d_ref[...], stack_ref[...],
                preferred_element_type=jnp.float32) + b_ref[...]   # (Cout, HW)

    # ---- fused DenseNet concat: original channels passthrough + new ones ----
    out_ref[0, :Cin, :] = x
    out_ref[0, Cin:, :] = y.astype(out_ref.dtype)

    # ---- per-image batch statistics of the new channels, emitted while the
    #      data is still in VMEM (consumed by the next layer's BN). ----
    sum_ref[0] = jnp.sum(y, axis=-1, keepdims=True)
    ssq_ref[0] = jnp.sum(y * y, axis=-1, keepdims=True)


def conv_block_pallas(x, scale, shift, w2d, bias, masks, H, W):
    """One conv_block (BN -> ReLU -> Conv3x3 pad=1) fused with the dense concat.

    x : (N, Cin, H*W) channel-major, flattened spatial on lanes.
    Returns:
      out  : (N, Cin+Cout, H*W) = concat([x, conv_block(x)], channel axis)
      psum : (N, Cout, 1)       per-image sums of the new channels
      pssq : (N, Cout, 1)       per-image sums of squares of the new channels
    """
    N, Cin, HW = x.shape
    Cout = w2d.shape[0]
    Ctot = Cin + Cout

    kernel = functools.partial(_bn_relu_conv3x3_kernel, H=H, W=W)

    # Rough per-step VMEM footprint (double-buffered gridded operands + resident
    # params/masks + im2col scratch) with headroom; clamped generation-aware.
    f32 = 4
    x_blk = _round_up(Cin, 8) * _round_up(HW, 128) * f32
    out_blk = _round_up(Ctot, 8) * _round_up(HW, 128) * f32
    stat_blk = 2 * _round_up(Cout, 8) * 128 * f32
    w_blk = _round_up(Cout, 8) * _round_up(9 * Cin, 128) * f32
    vec_blk = (2 * _round_up(Cin, 8) + _round_up(Cout, 8)) * 128 * f32
    mask_blk = _round_up(9, 8) * _round_up(HW, 128) * f32
    stack_blk = _round_up(9 * Cin, 8) * _round_up(HW, 128) * f32
    need = (2 * (x_blk + out_blk + stat_blk)
            + w_blk + vec_blk + mask_blk + stack_blk + (8 << 20))
    vmem_limit = int(min(max(need, 16 << 20),
                         int(0.85 * _vmem_capacity_bytes())))

    cost = pl.CostEstimate(
        flops=2 * N * HW * 9 * Cin * Cout,
        transcendentals=0,
        bytes_accessed=f32 * (N * Cin * HW + N * Ctot * HW + 9 * Cin * Cout
                              + 2 * Cin + Cout + 9 * HW + 2 * N * Cout),
    )

    # N=2 already gives both v7x TensorCores one image each; at larger N,
    # several images per grid step would amortize the ~0.35us step overhead.
    out_shape = (jax.ShapeDtypeStruct((N, Ctot, HW), jnp.float32),
                 jax.ShapeDtypeStruct((N, Cout, 1), jnp.float32),
                 jax.ShapeDtypeStruct((N, Cout, 1), jnp.float32))

    return pl.pallas_call(
        kernel,
        out_shape=out_shape,
        grid_spec=pltpu.PrefetchScalarGridSpec(
            num_scalar_prefetch=0,
            grid=(N,),
            in_specs=[
                pl.BlockSpec((1, Cin, HW), lambda n: (n, 0, 0)),   # activation
                pl.BlockSpec((Cin, 1), lambda n: (0, 0)),          # BN scale (resident)
                pl.BlockSpec((Cin, 1), lambda n: (0, 0)),          # BN shift (resident)
                pl.BlockSpec((Cout, 9 * Cin), lambda n: (0, 0)),   # weights (resident)
                pl.BlockSpec((Cout, 1), lambda n: (0, 0)),         # bias (resident)
                pl.BlockSpec((9, HW), lambda n: (0, 0)),           # tap masks (resident)
            ],
            out_specs=[
                pl.BlockSpec((1, Ctot, HW), lambda n: (n, 0, 0)),  # [x | new]
                pl.BlockSpec((1, Cout, 1), lambda n: (n, 0, 0)),   # per-image sums
                pl.BlockSpec((1, Cout, 1), lambda n: (n, 0, 0)),   # per-image sumsq
            ],
            scratch_shapes=[pltpu.VMEM((9 * Cin, HW), jnp.float32)],
        ),
        compiler_params=pltpu.CompilerParams(
            dimension_semantics=("parallel",),
            vmem_limit_bytes=vmem_limit,
        ),
        cost_estimate=cost,
    )(x, scale, shift, w2d, bias, masks)


class DenseBlockPallas:
    """JAX/Pallas port of the PyTorch DenseBlock (training-mode BatchNorm)."""

    def __init__(self, num_convs, input_channels, num_channels, key):
        self.params = []
        for i in range(num_convs):
            cin = input_channels + i * num_channels
            cout = num_channels
            key, kw, kb = jax.random.split(key, 3)
            gamma = jnp.ones((cin,), jnp.float32)     # BN default init
            beta = jnp.zeros((cin,), jnp.float32)
            fan_in = cin * 9
            bound = 1.0 / (fan_in ** 0.5)
            w = jax.random.uniform(kw, (cout, cin, 3, 3), jnp.float32,
                                   -bound, bound)     # OIHW, like nn.Conv2d
            b = jax.random.uniform(kb, (cout,), jnp.float32, -bound, bound)
            self.params.append((gamma, beta, w, b))

    def __call__(self, x_nchw):
        N, C, H, W = x_nchw.shape
        HW = H * W
        x = x_nchw.reshape(N, C, HW)    # channel-major, spatial flat on lanes
        masks = _make_tap_masks(H, W)   # (9, HW), shared across all layers

        # Running per-channel batch-stat accumulators over (N, H, W).  The
        # dense concat passes old channels through unchanged, so their sums
        # never need recomputing: only the original input is swept here, and
        # each layer's kernel emits the sums for the channels it creates.
        count = float(N * HW)
        sum_c = jnp.sum(x, axis=(0, 2))
        ssq_c = jnp.sum(x * x, axis=(0, 2))

        for gamma, beta, w, b in self.params:
            cin = x.shape[1]
            cout = w.shape[0]
            mean = sum_c / count
            var = jnp.maximum(ssq_c / count - mean * mean, 0.0)   # biased, f32
            scale = gamma * jax.lax.rsqrt(var + 1e-5)
            shift = beta - mean * scale
            # OIHW (Cout,Cin,3,3) -> (Cout, 3, 3, Cin) -> (Cout, 9*Cin):
            # column index = (dy*3 + dx)*Cin + c, matching the kernel's stack.
            w2d = jnp.transpose(w, (0, 2, 3, 1)).reshape(cout, 9 * cin)
            x, psum, pssq = conv_block_pallas(
                x, scale.reshape(cin, 1), shift.reshape(cin, 1),
                w2d, b.reshape(cout, 1), masks, H, W)
            sum_c = jnp.concatenate([sum_c, jnp.sum(psum, axis=0).reshape(cout)])
            ssq_c = jnp.concatenate([ssq_c, jnp.sum(pssq, axis=0).reshape(cout)])

        return x.reshape(N, x.shape[1], H, W)          # back to NCHW


# ------------------------- pure-JAX reference -------------------------------
def _conv_block_ref_nchw(x, gamma, beta, w, b):
    mean = jnp.mean(x, axis=(0, 2, 3), keepdims=True)
    var = jnp.mean((x - mean) ** 2, axis=(0, 2, 3), keepdims=True)  # biased
    a = (x - mean) * jax.lax.rsqrt(var + 1e-5) * gamma.reshape(1, -1, 1, 1) \
        + beta.reshape(1, -1, 1, 1)
    a = jnp.maximum(a, 0.0)
    y = jax.lax.conv_general_dilated(
        a, w, window_strides=(1, 1), padding=((1, 1), (1, 1)),
        dimension_numbers=('NCHW', 'OIHW', 'NCHW'))
    return y + b.reshape(1, -1, 1, 1)


def _dense_block_ref(x_nchw, params):
    x = x_nchw
    for gamma, beta, w, b in params:
        y = _conv_block_ref_nchw(x, gamma, beta, w, b)
        x = jnp.concatenate([x, y], axis=1)
    return x


if __name__ == "__main__":
    # DenseBlock(num_convs=2, input_channels=4, num_channels=4) on (2, 4, 16, 16).
    x = jax.random.normal(jax.random.PRNGKey(0), (2, 4, 16, 16), jnp.float32)

    blk = DenseBlockPallas(num_convs=2, input_channels=4, num_channels=4,
                           key=jax.random.PRNGKey(1))

    out = jax.block_until_ready(blk(x))
    assert out.shape == (2, 4 + 2 * 4, 16, 16), out.shape

    ref = jax.block_until_ready(_dense_block_ref(x, blk.params))
    assert jnp.allclose(out, ref, atol=1e-3, rtol=1e-3), \
        float(jnp.max(jnp.abs(out - ref)))

    print("KERNEL_OK")
</pallas_src>

<mosaic_0001>
module attributes {stable_mosaic.version = 11 : i64} {
  func.func @_bn_relu_conv3x3_kernel(%arg0: i32, %arg1: memref<1x4x256xf32, #tpu.memory_space<vmem>>, %arg2: memref<4x1xf32, #tpu.memory_space<vmem>>, %arg3: memref<4x1xf32, #tpu.memory_space<vmem>>, %arg4: memref<4x36xf32, #tpu.memory_space<vmem>>, %arg5: memref<4x1xf32, #tpu.memory_space<vmem>>, %arg6: memref<9x256xf32, #tpu.memory_space<vmem>>, %arg7: memref<1x8x256xf32, #tpu.memory_space<vmem>>, %arg8: memref<1x4x1xf32, #tpu.memory_space<vmem>>, %arg9: memref<1x4x1xf32, #tpu.memory_space<vmem>>, %arg10: memref<36x256xf32, #tpu.memory_space<vmem>>) attributes {dimension_semantics = [#tpu.dimension_semantics<parallel>], iteration_bounds = array<i64: 2>, scalar_prefetch = 0 : i64, scratch_operands = 1 : i64, tpu.core_type = #tpu.core_type<tc>, window_params = [{transform_indices = @transform_0, window_bounds = array<i64: 1, 4, 256>}, {pipeline_mode = #tpu.pipeline_mode<synchronous>, transform_indices = @transform_1, window_bounds = array<i64: 4, 1>}, {pipeline_mode = #tpu.pipeline_mode<synchronous>, transform_indices = @transform_2, window_bounds = array<i64: 4, 1>}, {pipeline_mode = #tpu.pipeline_mode<synchronous>, transform_indices = @transform_3, window_bounds = array<i64: 4, 36>}, {pipeline_mode = #tpu.pipeline_mode<synchronous>, transform_indices = @transform_4, window_bounds = array<i64: 4, 1>}, {pipeline_mode = #tpu.pipeline_mode<synchronous>, transform_indices = @transform_5, window_bounds = array<i64: 9, 256>}, {transform_indices = @transform_6, window_bounds = array<i64: 1, 8, 256>}, {transform_indices = @transform_7, window_bounds = array<i64: 1, 4, 1>}, {transform_indices = @transform_8, window_bounds = array<i64: 1, 4, 1>}]} {
    %c0 = arith.constant 0 : index
    %c0_0 = arith.constant 0 : index
    %c0_1 = arith.constant 0 : index
    %0 = vector.load %arg1[%c0, %c0_0, %c0_1] : memref<1x4x256xf32, #tpu.memory_space<vmem>>, vector<1x4x256xf32>
    %1 = vector.shape_cast %0 : vector<1x4x256xf32> to vector<4x256xf32>
    %c0_2 = arith.constant 0 : index
    %c0_3 = arith.constant 0 : index
    %2 = vector.load %arg2[%c0_2, %c0_3] : memref<4x1xf32, #tpu.memory_space<vmem>>, vector<4x1xf32>
    %3 = vector.broadcast %2 : vector<4x1xf32> to vector<4x256xf32>
    %4 = arith.mulf %1, %3 : vector<4x256xf32>
    %c0_4 = arith.constant 0 : index
    %c0_5 = arith.constant 0 : index
    %5 = vector.load %arg3[%c0_4, %c0_5] : memref<4x1xf32, #tpu.memory_space<vmem>>, vector<4x1xf32>
    %6 = vector.broadcast %5 : vector<4x1xf32> to vector<4x256xf32>
    %7 = arith.addf %4, %6 : vector<4x256xf32>
    %cst = arith.constant 0.000000e+00 : f32
    %8 = vector.broadcast %cst : f32 to vector<4x256xf32>
    %9 = arith.maximumf %7, %8 : vector<4x256xf32>
    %c17_i32 = arith.constant 17 : i32
    %10 = tpu.dynamic_rotate %9 by %c17_i32 dim 1 : vector<4x256xf32>, i32 -> vector<4x256xf32>
    %c0_6 = arith.constant 0 : index
    %c0_7 = arith.constant 0 : index
    %11 = vector.load %arg6[%c0_6, %c0_7] : memref<9x256xf32, #tpu.memory_space<vmem>>, vector<1x256xf32>
    %12 = vector.broadcast %11 : vector<1x256xf32> to vector<4x256xf32>
    %13 = arith.mulf %10, %12 : vector<4x256xf32>
    %c0_8 = arith.constant 0 : index
    %c0_9 = arith.constant 0 : index
    %14 = vector.load %arg10[%c0_8, %c0_9] : memref<36x256xf32, #tpu.memory_space<vmem>>, vector<4x256xf32>
    tpu.vector_store %arg10[%c0_8, %c0_9], %13 {strides = array<i32>} : memref<36x256xf32, #tpu.memory_space<vmem>>, vector<4x256xf32>,
    %c16_i32 = arith.constant 16 : i32
    %15 = tpu.dynamic_rotate %9 by %c16_i32 dim 1 : vector<4x256xf32>, i32 -> vector<4x256xf32>
    %c1 = arith.constant 1 : index
    %c0_10 = arith.constant 0 : index
    %16 = vector.load %arg6[%c1, %c0_10] : memref<9x256xf32, #tpu.memory_space<vmem>>, vector<1x256xf32>
    %17 = vector.broadcast %16 : vector<1x256xf32> to vector<4x256xf32>
    %18 = arith.mulf %15, %17 : vector<4x256xf32>
    %c4 = arith.constant 4 : index
    %c0_11 = arith.constant 0 : index
    %19 = vector.load %arg10[%c4, %c0_11] : memref<36x256xf32, #tpu.memory_space<vmem>>, vector<4x256xf32>
    tpu.vector_store %arg10[%c4, %c0_11], %18 {strides = array<i32>} : memref<36x256xf32, #tpu.memory_space<vmem>>, vector<4x256xf32>,
    %c15_i32 = arith.constant 15 : i32
    %20 = tpu.dynamic_rotate %9 by %c15_i32 dim 1 : vector<4x256xf32>, i32 -> vector<4x256xf32>
    %c2 = arith.constant 2 : index
    %c0_12 = arith.constant 0 : index
    %21 = vector.load %arg6[%c2, %c0_12] : memref<9x256xf32, #tpu.memory_space<vmem>>, vector<1x256xf32>
    %22 = vector.broadcast %21 : vector<1x256xf32> to vector<4x256xf32>
    %23 = arith.mulf %20, %22 : vector<4x256xf32>
    %c8 = arith.constant 8 : index
    %c0_13 = arith.constant 0 : index
    %24 = vector.load %arg10[%c8, %c0_13] : memref<36x256xf32, #tpu.memory_space<vmem>>, vector<4x256xf32>
    tpu.vector_store %arg10[%c8, %c0_13], %23 {strides = array<i32>} : memref<36x256xf32, #tpu.memory_space<vmem>>, vector<4x256xf32>,
    %c1_i32 = arith.constant 1 : i32
    %25 = tpu.dynamic_rotate %9 by %c1_i32 dim 1 : vector<4x256xf32>, i32 -> vector<4x256xf32>
    %c3 = arith.constant 3 : index
    %c0_14 = arith.constant 0 : index
    %26 = vector.load %arg6[%c3, %c0_14] : memref<9x256xf32, #tpu.memory_space<vmem>>, vector<1x256xf32>
    %27 = vector.broadcast %26 : vector<1x256xf32> to vector<4x256xf32>
    %28 = arith.mulf %25, %27 : vector<4x256xf32>
    %c12 = arith.constant 12 : index
    %c0_15 = arith.constant 0 : index
    %29 = vector.load %arg10[%c12, %c0_15] : memref<36x256xf32, #tpu.memory_space<vmem>>, vector<4x256xf32>
    tpu.vector_store %arg10[%c12, %c0_15], %28 {strides = array<i32>} : memref<36x256xf32, #tpu.memory_space<vmem>>, vector<4x256xf32>,
    %c16 = arith.constant 16 : index
    %c0_16 = arith.constant 0 : index
    %30 = vector.load %arg10[%c16, %c0_16] : memref<36x256xf32, #tpu.memory_space<vmem>>, vector<4x256xf32>
    tpu.vector_store %arg10[%c16, %c0_16], %9 {strides = array<i32>} : memref<36x256xf32, #tpu.memory_space<vmem>>, vector<4x256xf32>,
    %c255_i32 = arith.constant 255 : i32
    %31 = tpu.dynamic_rotate %9 by %c255_i32 dim 1 : vector<4x256xf32>, i32 -> vector<4x256xf32>
    %c5 = arith.constant 5 : index
    %c0_17 = arith.constant 0 : index
    %32 = vector.load %arg6[%c5, %c0_17] : memref<9x256xf32, #tpu.memory_space<vmem>>, vector<1x256xf32>
    %33 = vector.broadcast %32 : vector<1x256xf32> to vector<4x256xf32>
    %34 = arith.mulf %31, %33 : vector<4x256xf32>
    %c20 = arith.constant 20 : index
    %c0_18 = arith.constant 0 : index
    %35 = vector.load %arg10[%c20, %c0_18] : memref<36x256xf32, #tpu.memory_space<vmem>>, vector<4x256xf32>
    tpu.vector_store %arg10[%c20, %c0_18], %34 {strides = array<i32>} : memref<36x256xf32, #tpu.memory_space<vmem>>, vector<4x256xf32>,
    %c241_i32 = arith.constant 241 : i32
    %36 = tpu.dynamic_rotate %9 by %c241_i32 dim 1 : vector<4x256xf32>, i32 -> vector<4x256xf32>
    %c6 = arith.constant 6 : index
    %c0_19 = arith.constant 0 : index
    %37 = vector.load %arg6[%c6, %c0_19] : memref<9x256xf32, #tpu.memory_space<vmem>>, vector<1x256xf32>
    %38 = vector.broadcast %37 : vector<1x256xf32> to vector<4x256xf32>
    %39 = arith.mulf %36, %38 : vector<4x256xf32>
    %c24 = arith.constant 24 : index
    %c0_20 = arith.constant 0 : index
    %40 = vector.load %arg10[%c24, %c0_20] : memref<36x256xf32, #tpu.memory_space<vmem>>, vector<4x256xf32>
    tpu.vector_store %arg10[%c24, %c0_20], %39 {strides = array<i32>} : memref<36x256xf32, #tpu.memory_space<vmem>>, vector<4x256xf32>,
    %c240_i32 = arith.constant 240 : i32
    %41 = tpu.dynamic_rotate %9 by %c240_i32 dim 1 : vector<4x256xf32>, i32 -> vector<4x256xf32>
    %c7 = arith.constant 7 : index
    %c0_21 = arith.constant 0 : index
    %42 = vector.load %arg6[%c7, %c0_21] : memref<9x256xf32, #tpu.memory_space<vmem>>, vector<1x256xf32>
    %43 = vector.broadcast %42 : vector<1x256xf32> to vector<4x256xf32>
    %44 = arith.mulf %41, %43 : vector<4x256xf32>
    %c28 = arith.constant 28 : index
    %c0_22 = arith.constant 0 : index
    %45 = vector.load %arg10[%c28, %c0_22] : memref<36x256xf32, #tpu.memory_space<vmem>>, vector<4x256xf32>
    tpu.vector_store %arg10[%c28, %c0_22], %44 {strides = array<i32>} : memref<36x256xf32, #tpu.memory_space<vmem>>, vector<4x256xf32>,
    %c239_i32 = arith.constant 239 : i32
    %46 = tpu.dynamic_rotate %9 by %c239_i32 dim 1 : vector<4x256xf32>, i32 -> vector<4x256xf32>
    %c8_23 = arith.constant 8 : index
    %c0_24 = arith.constant 0 : index
    %47 = vector.load %arg6[%c8_23, %c0_24] : memref<9x256xf32, #tpu.memory_space<vmem>>, vector<1x256xf32>
    %48 = vector.broadcast %47 : vector<1x256xf32> to vector<4x256xf32>
    %49 = arith.mulf %46, %48 : vector<4x256xf32>
    %c32 = arith.constant 32 : index
    %c0_25 = arith.constant 0 : index
    %50 = vector.load %arg10[%c32, %c0_25] : memref<36x256xf32, #tpu.memory_space<vmem>>, vector<4x256xf32>
    tpu.vector_store %arg10[%c32, %c0_25], %49 {strides = array<i32>} : memref<36x256xf32, #tpu.memory_space<vmem>>, vector<4x256xf32>,
    %c0_26 = arith.constant 0 : index
    %c0_27 = arith.constant 0 : index
    %51 = vector.load %arg4[%c0_26, %c0_27] : memref<4x36xf32, #tpu.memory_space<vmem>>, vector<4x36xf32>
    %c0_28 = arith.constant 0 : index
    %c0_29 = arith.constant 0 : index
    %52 = vector.load %arg10[%c0_28, %c0_29] : memref<36x256xf32, #tpu.memory_space<vmem>>, vector<36x256xf32>
    %cst_30 = arith.constant dense<0.000000e+00> : vector<4x256xf32>
    %53 = tpu.matmul %51, %52, %cst_30 {dimension_numbers = #tpu.dot_dimension_numbers<[1], [0], [0], [1], [0, 0, 1, 1], [], []>} : vector<4x36xf32>, vector<36x256xf32>, vector<4x256xf32> -> vector<4x256xf32>
    %c0_31 = arith.constant 0 : index
    %c0_32 = arith.constant 0 : index
    %54 = vector.load %arg5[%c0_31, %c0_32] : memref<4x1xf32, #tpu.memory_space<vmem>>, vector<4x1xf32>
    %55 = vector.broadcast %54 : vector<4x1xf32> to vector<4x256xf32>
    %56 = arith.addf %53, %55 : vector<4x256xf32>
    %c0_33 = arith.constant 0 : index
    %c0_34 = arith.constant 0 : index
    %c0_35 = arith.constant 0 : index
    %57 = vector.load %arg7[%c0_33, %c0_34, %c0_35] : memref<1x8x256xf32, #tpu.memory_space<vmem>>, vector<1x4x256xf32>
    %58 = vector.shape_cast %57 : vector<1x4x256xf32> to vector<4x256xf32>
    %59 = vector.shape_cast %1 : vector<4x256xf32> to vector<1x4x256xf32>
    tpu.vector_store %arg7[%c0_33, %c0_34, %c0_35], %59 {strides = array<i32>} : memref<1x8x256xf32, #tpu.memory_space<vmem>>, vector<1x4x256xf32>,
    %c0_36 = arith.constant 0 : index
    %c4_37 = arith.constant 4 : index
    %c0_38 = arith.constant 0 : index
    %60 = vector.load %arg7[%c0_36, %c4_37, %c0_38] : memref<1x8x256xf32, #tpu.memory_space<vmem>>, vector<1x4x256xf32>
    %61 = vector.shape_cast %60 : vector<1x4x256xf32> to vector<4x256xf32>
    %62 = vector.shape_cast %56 : vector<4x256xf32> to vector<1x4x256xf32>
    tpu.vector_store %arg7[%c0_36, %c4_37, %c0_38], %62 {strides = array<i32>} : memref<1x8x256xf32, #tpu.memory_space<vmem>>, vector<1x4x256xf32>,
    %cst_39 = arith.constant dense<0.000000e+00> : vector<4xf32>
    %63 = vector.multi_reduction <add>, %56, %cst_39 [1] : vector<4x256xf32> to vector<4xf32>
    %64 = vector.shape_cast %63 : vector<4xf32> to vector<4x1xf32>
    %c0_40 = arith.constant 0 : index
    %c0_41 = arith.constant 0 : index
    %c0_42 = arith.constant 0 : index
    %65 = vector.load %arg8[%c0_40, %c0_41, %c0_42] : memref<1x4x1xf32, #tpu.memory_space<vmem>>, vector<1x4x1xf32>
    %66 = vector.shape_cast %65 : vector<1x4x1xf32> to vector<4x1xf32>
    %67 = vector.shape_cast %64 : vector<4x1xf32> to vector<1x4x1xf32>
    tpu.vector_store %arg8[%c0_40, %c0_41, %c0_42], %67 {strides = array<i32>} : memref<1x4x1xf32, #tpu.memory_space<vmem>>, vector<1x4x1xf32>,
    %68 = arith.mulf %56, %56 : vector<4x256xf32>
    %cst_43 = arith.constant dense<0.000000e+00> : vector<4xf32>
    %69 = vector.multi_reduction <add>, %68, %cst_43 [1] : vector<4x256xf32> to vector<4xf32>
    %70 = vector.shape_cast %69 : vector<4xf32> to vector<4x1xf32>
    %c0_44 = arith.constant 0 : index
    %c0_45 = arith.constant 0 : index
    %c0_46 = arith.constant 0 : index
    %71 = vector.load %arg9[%c0_44, %c0_45, %c0_46] : memref<1x4x1xf32, #tpu.memory_space<vmem>>, vector<1x4x1xf32>
    %72 = vector.shape_cast %71 : vector<1x4x1xf32> to vector<4x1xf32>
    %73 = vector.shape_cast %70 : vector<4x1xf32> to vector<1x4x1xf32>
    tpu.vector_store %arg9[%c0_44, %c0_45, %c0_46], %73 {strides = array<i32>} : memref<1x4x1xf32, #tpu.memory_space<vmem>>, vector<1x4x1xf32>,
    return
  }
  func.func @transform_0(%arg0: i32) -> (i32, i32, i32) {
    %c0_i32 = arith.constant 0 : i32
    %c0_i32_0 = arith.constant 0 : i32
    %c0_i32_1 = arith.constant 0 : i32
    return %arg0, %c0_i32, %c0_i32_0 : i32, i32, i32
  }
  func.func @transform_1(%arg0: i32) -> (i32, i32) {
    %c0_i32 = arith.constant 0 : i32
    %c0_i32_0 = arith.constant 0 : i32
    %c0_i32_1 = arith.constant 0 : i32
    return %c0_i32, %c0_i32_0 : i32, i32
  }
  func.func @transform_2(%arg0: i32) -> (i32, i32) {
    %c0_i32 = arith.constant 0 : i32
    %c0_i32_0 = arith.constant 0 : i32
    %c0_i32_1 = arith.constant 0 : i32
    return %c0_i32, %c0_i32_0 : i32, i32
  }
  func.func @transform_3(%arg0: i32) -> (i32, i32) {
    %c0_i32 = arith.constant 0 : i32
    %c0_i32_0 = arith.constant 0 : i32
    %c0_i32_1 = arith.constant 0 : i32
    return %c0_i32, %c0_i32_0 : i32, i32
  }
  func.func @transform_4(%arg0: i32) -> (i32, i32) {
    %c0_i32 = arith.constant 0 : i32
    %c0_i32_0 = arith.constant 0 : i32
    %c0_i32_1 = arith.constant 0 : i32
    return %c0_i32, %c0_i32_0 : i32, i32
  }
  func.func @transform_5(%arg0: i32) -> (i32, i32) {
    %c0_i32 = arith.constant 0 : i32
    %c0_i32_0 = arith.constant 0 : i32
    %c0_i32_1 = arith.constant 0 : i32
    return %c0_i32, %c0_i32_0 : i32, i32
  }
  func.func @transform_6(%arg0: i32) -> (i32, i32, i32) {
    %c0_i32 = arith.constant 0 : i32
    %c0_i32_0 = arith.constant 0 : i32
    %c0_i32_1 = arith.constant 0 : i32
    return %arg0, %c0_i32, %c0_i32_0 : i32, i32, i32
  }
  func.func @transform_7(%arg0: i32) -> (i32, i32, i32) {
    %c0_i32 = arith.constant 0 : i32
    %c0_i32_0 = arith.constant 0 : i32
    %c0_i32_1 = arith.constant 0 : i32
    return %arg0, %c0_i32, %c0_i32_0 : i32, i32, i32
  }
  func.func @transform_8(%arg0: i32) -> (i32, i32, i32) {
    %c0_i32 = arith.constant 0 : i32
    %c0_i32_0 = arith.constant 0 : i32
    %c0_i32_1 = arith.constant 0 : i32
    return %arg0, %c0_i32, %c0_i32_0 : i32, i32, i32
  }
}

</mosaic_0001>

<llo_original>
// kernel: tpu_custom_call.1
$region0: #{tpu_custom_call.1}
  #allocation0 [shape = 'u32[]', space=smem, size = 0x4, offset = 0x4, fixed_abs, tag = 'smem constant byte address 0x4 - core index']
  #allocation1 [shape = 'u32[144,128]{1,0:T(1,128)}', space=vmem, size = 0x12000, scoped, tag = 'internal scratch']
  #allocation2 [shape = 'f32[36,256]{1,0:T(8,128)}', space=vmem, size = 0xa000, scoped, tag = 'scratch operand']
  %s0 = inlined_call_operand.hbm [shape: f32[2,4,256], index: 0, kind: input, shape index: {}]
  %s1 = inlined_call_operand.vmem [shape: f32[4,1], index: 1, kind: input, shape index: {}]
  %s2 = inlined_call_operand.vmem [shape: f32[4,1], index: 2, kind: input, shape index: {}]
  %s3 = inlined_call_operand.vmem [shape: f32[4,36], index: 3, kind: input, shape index: {}]
  %s4 = inlined_call_operand.vmem [shape: f32[4,1], index: 4, kind: input, shape index: {}]
  %s5 = inlined_call_operand.hbm [shape: f32[9,256], index: 5, kind: input, shape index: {}]
  %s6 = inlined_call_operand.hbm [shape: f32[2,8,256], index: 6, kind: output, shape index: {0}]
  %s7 = inlined_call_operand.vmem [shape: f32[2,4,1], index: 7, kind: output, shape index: {1}]
  %s8 = inlined_call_operand.vmem [shape: f32[2,4,1], index: 8, kind: output, shape index: {2}]
  %9 = xla_tuple %s6, %s7, %s8
  %s10 = sld [smem:[#allocation0]]
  $region81: #{tpu_custom_call.1} parent=0
    _
  %s12 = ssub.s32 1, %s10
  %s13 = scalar_select 0, %s12, %s10
  $region1: #{tpu_custom_call.1} parent=0
    #allocation3 [shape = 'u8[8192]{0}', space=vmem, size = 0x2000, scoped, tag = 'input window, operand 0']
    #allocation4 [shape = 's32[2]{0}', space=sflag, size = 0x8, scoped, tag = 'scoped memory for tpu_custom_call.1']
    #allocation5 [shape = 's32[2]{0}', space=sflag, size = 0x8, scoped, tag = 'scoped memory for tpu_custom_call.1']
    #allocation6 [shape = 'u8[16384]{0}', space=vmem, size = 0x4000, scoped, tag = 'input window, operand 5, single buffered']
    #allocation7 [shape = 's32[1]{0}', space=sflag, size = 0x4, scoped, tag = 'scoped memory for tpu_custom_call.1']
    #allocation8 [shape = 'u8[16384]{0}', space=vmem, size = 0x4000, scoped, tag = 'output window, operand 0']
    %14 = vsyncpa [#allocation4], 0
    %s15 = scalar_lea.sflag [#allocation4], 1
    %16 = vsyncpa %s15, 0
    %17 = vsyncpa [#allocation7], 0
    %18 = vsyncpa [#allocation5], 0
    %s19 = scalar_lea.sflag [#allocation5], 1
    %20 = vsyncpa %s19, 0
    loop: start=0, step=1, limit=4
    $region2: #{tpu_custom_call.1} parent=1 // loop_pre_header
      _
    $region3: #{tpu_custom_call.1} parent=1 // loop_header
      %s22 = sphi 0, %s26
      %p23 = scmp.ge.s32.totalorder %s22, 4
      %s32 = sphi 0, %s34
      %s35 = sphi 0, %s32
      %s36 = sphi 0, %s35
      %s52 = sphi 0, %s36
      %s56 = sphi 0, %s56
      %s58 = sphi 0, %s56
      %s59 = sphi 0, %s58
      %s73 = sphi 0, %s59
      %s77 = sphi 0, %s77
      %s79 = sphi 0, %s77
      %s80 = sphi 0, %s79
      %s94 = sphi 0, %s80
      %s98 = sphi 0, %s98
      %s100 = sphi 0, %s98
      %s101 = sphi 0, %s100
      %s115 = sphi 0, %s101
      %s119 = sphi 0, %s119
      %s121 = sphi 0, %s119
      %s122 = sphi 0, %s121
      %s136 = sphi 0, %s122
      %s140 = sphi 0, %s140
      %s142 = sphi 0, %s140
      %s143 = sphi 0, %s142
      %s157 = sphi 0, %s143
      %s163 = sphi 0, %s165
      %s166 = sphi 0, %s163
      %s167 = sphi 0, %s166
      %s183 = sphi 0, %s167
      %s189 = sphi 0, %s191
      %s192 = sphi 0, %s189
      %s193 = sphi 0, %s192
      %s209 = sphi 0, %s193
      %s215 = sphi 0, %s217
      %s218 = sphi 0, %s215
      %s219 = sphi 0, %s218
      %s235 = sphi 0, %s219
    $region4: #{tpu_custom_call.1} parent=1 // loop_header_branch
      %25 = sbr.rel (%p23) target = $region8
    $region5: #{tpu_custom_call.1} parent=1 // loop_body
      %s27 = ssub.s32 %s22, 1
      %s28 = ssub.s32 %s22, 2
      %s29 = sadd.s32 %s22, 1
      %s30 = ssub.s32 %s22, %s29
      %p31 = scmp.eq.s32.totalorder %s30, 0
      %s33 = sadd.s32 %s32, 1
      %s34 = scalar_select %p31, %s32, %s33
      %p37 = pneg %p31
      %p38 = scmp.eq.s32.totalorder %s22, 1
      %p39 = por %p37, %p38
      %p40 = scmp.ne.s32.totalorder %s32, %s35
      %p41 = scmp.eq.s32.totalorder %s22, 0
      %p42 = por %p40, %p41
      %p43 = scmp.ne.s32.totalorder %s32, %s35
      %p44 = scmp.eq.s32.totalorder %s27, 1
      %p45 = por %p43, %p44
      %p46 = scmp.ne.s32.totalorder %s35, %s36
      %p47 = scmp.eq.s32.totalorder %s27, 0
      %p48 = por %p46, %p47
      %p49 = scmp.ne.s32.totalorder %s35, %s36
      %p50 = scmp.eq.s32.totalorder %s28, 1
      %p51 = por %p49, %p50
      %p53 = scmp.ne.s32.totalorder %s36, %s52
      %p54 = scmp.eq.s32.totalorder %s28, 0
      %p55 = por %p53, %p54
      %s57 = sadd.s32 %s56, 1
      %p60 = scmp.eq.s32.totalorder %s22, 1
      %p61 = scmp.ne.s32.totalorder %s56, %s58
      %p62 = scmp.eq.s32.totalorder %s22, 0
      %p63 = por %p61, %p62
      %p64 = scmp.ne.s32.totalorder %s56, %s58
      %p65 = scmp.eq.s32.totalorder %s27, 1
      %p66 = por %p64, %p65
      %p67 = scmp.ne.s32.totalorder %s58, %s59
      %p68 = scmp.eq.s32.totalorder %s27, 0
      %p69 = por %p67, %p68
      %p70 = scmp.ne.s32.totalorder %s58, %s59
      %p71 = scmp.eq.s32.totalorder %s28, 1
      %p72 = por %p70, %p71
      %p74 = scmp.ne.s32.totalorder %s59, %s73
      %p75 = scmp.eq.s32.totalorder %s28, 0
      %p76 = por %p74, %p75
      %s78 = sadd.s32 %s77, 1
      %p81 = scmp.eq.s32.totalorder %s22, 1
      %p82 = scmp.ne.s32.totalorder %s77, %s79
      %p83 = scmp.eq.s32.totalorder %s22, 0
      %p84 = por %p82, %p83
      %p85 = scmp.ne.s32.totalorder %s77, %s79
      %p86 = scmp.eq.s32.totalorder %s27, 1
      %p87 = por %p85, %p86
      %p88 = scmp.ne.s32.totalorder %s79, %s80
      %p89 = scmp.eq.s32.totalorder %s27, 0
      %p90 = por %p88, %p89
      %p91 = scmp.ne.s32.totalorder %s79, %s80
      %p92 = scmp.eq.s32.totalorder %s28, 1
      %p93 = por %p91, %p92
      %p95 = scmp.ne.s32.totalorder %s80, %s94
      %p96 = scmp.eq.s32.totalorder %s28, 0
      %p97 = por %p95, %p96
      %s99 = sadd.s32 %s98, 1
      %p102 = scmp.eq.s32.totalorder %s22, 1
      %p103 = scmp.ne.s32.totalorder %s98, %s100
      %p104 = scmp.eq.s32.totalorder %s22, 0
      %p105 = por %p103, %p104
      %p106 = scmp.ne.s32.totalorder %s98, %s100
      %p107 = scmp.eq.s32.totalorder %s27, 1
      %p108 = por %p106, %p107
      %p109 = scmp.ne.s32.totalorder %s100, %s101
      %p110 = scmp.eq.s32.totalorder %s27, 0
      %p111 = por %p109, %p110
      %p112 = scmp.ne.s32.totalorder %s100, %s101
      %p113 = scmp.eq.s32.totalorder %s28, 1
      %p114 = por %p112, %p113
      %p116 = scmp.ne.s32.totalorder %s101, %s115
      %p117 = scmp.eq.s32.totalorder %s28, 0
      %p118 = por %p116, %p117
      %s120 = sadd.s32 %s119, 1
      %p123 = scmp.eq.s32.totalorder %s22, 1
      %p124 = scmp.ne.s32.totalorder %s119, %s121
      %p125 = scmp.eq.s32.totalorder %s22, 0
      %p126 = por %p124, %p125
      %p127 = scmp.ne.s32.totalorder %s119, %s121
      %p128 = scmp.eq.s32.totalorder %s27, 1
      %p129 = por %p127, %p128
      %p130 = scmp.ne.s32.totalorder %s121, %s122
      %p131 = scmp.eq.s32.totalorder %s27, 0
      %p132 = por %p130, %p131
      %p133 = scmp.ne.s32.totalorder %s121, %s122
      %p134 = scmp.eq.s32.totalorder %s28, 1
      %p135 = por %p133, %p134
      %p137 = scmp.ne.s32.totalorder %s122, %s136
      %p138 = scmp.eq.s32.totalorder %s28, 0
      %p139 = por %p137, %p138
      %s141 = sadd.s32 %s140, 1
      %p144 = scmp.eq.s32.totalorder %s22, 1
      %p145 = scmp.ne.s32.totalorder %s140, %s142
      %p146 = scmp.eq.s32.totalorder %s22, 0
      %p147 = por %p145, %p146
      %p148 = scmp.ne.s32.totalorder %s140, %s142
      %p149 = scmp.eq.s32.totalorder %s27, 1
      %p150 = por %p148, %p149
      %p151 = scmp.ne.s32.totalorder %s142, %s143
      %p152 = scmp.eq.s32.totalorder %s27, 0
      %p153 = por %p151, %p152
      %p154 = scmp.ne.s32.totalorder %s142, %s143
      %p155 = scmp.eq.s32.totalorder %s28, 1
      %p156 = por %p154, %p155
      %p158 = scmp.ne.s32.totalorder %s143, %s157
      %p159 = scmp.eq.s32.totalorder %s28, 0
      %p160 = por %p158, %p159
      %s161 = ssub.s32 %s22, %s29
      %p162 = scmp.eq.s32.totalorder %s161, 0
      %s164 = sadd.s32 %s163, 1
      %s165 = scalar_select %p162, %s163, %s164
      %p168 = pneg %p162
      %p169 = scmp.eq.s32.totalorder %s22, 1
      %p170 = por %p168, %p169
      %p171 = scmp.ne.s32.totalorder %s163, %s166
      %p172 = scmp.eq.s32.totalorder %s22, 0
      %p173 = por %p171, %p172
      %p174 = scmp.ne.s32.totalorder %s163, %s166
      %p175 = scmp.eq.s32.totalorder %s27, 1
      %p176 = por %p174, %p175
      %p177 = scmp.ne.s32.totalorder %s166, %s167
      %p178 = scmp.eq.s32.totalorder %s27, 0
      %p179 = por %p177, %p178
      %p180 = scmp.ne.s32.totalorder %s166, %s167
      %p181 = scmp.eq.s32.totalorder %s28, 1
      %p182 = por %p180, %p181
      %p184 = scmp.ne.s32.totalorder %s167, %s183
      %p185 = scmp.eq.s32.totalorder %s28, 0
      %p186 = por %p184, %p185
      %s187 = ssub.s32 %s22, %s29
      %p188 = scmp.eq.s32.totalorder %s187, 0
      %s190 = sadd.s32 %s189, 1
      %s191 = scalar_select %p188, %s189, %s190
      %p194 = pneg %p188
      %p195 = scmp.eq.s32.totalorder %s22, 1
      %p196 = por %p194, %p195
      %p197 = scmp.ne.s32.totalorder %s189, %s192
      %p198 = scmp.eq.s32.totalorder %s22, 0
      %p199 = por %p197, %p198
      %p200 = scmp.ne.s32.totalorder %s189, %s192
      %p201 = scmp.eq.s32.totalorder %s27, 1
      %p202 = por %p200, %p201
      %p203 = scmp.ne.s32.totalorder %s192, %s193
      %p204 = scmp.eq.s32.totalorder %s27, 0
      %p205 = por %p203, %p204
      %p206 = scmp.ne.s32.totalorder %s192, %s193
      %p207 = scmp.eq.s32.totalorder %s28, 1
      %p208 = por %p206, %p207
      %p210 = scmp.ne.s32.totalorder %s193, %s209
      %p211 = scmp.eq.s32.totalorder %s28, 0
      %p212 = por %p210, %p211
      %s213 = ssub.s32 %s22, %s29
      %p214 = scmp.eq.s32.totalorder %s213, 0
      %s216 = sadd.s32 %s215, 1
      %s217 = scalar_select %p214, %s215, %s216
      %p220 = pneg %p214
      %p221 = scmp.eq.s32.totalorder %s22, 1
      %p222 = por %p220, %p221
      %p223 = scmp.ne.s32.totalorder %s215, %s218
      %p224 = scmp.eq.s32.totalorder %s22, 0
      %p225 = por %p223, %p224
      %p226 = scmp.ne.s32.totalorder %s215, %s218
      %p227 = scmp.eq.s32.totalorder %s27, 1
      %p228 = por %p226, %p227
      %p229 = scmp.ne.s32.totalorder %s218, %s219
      %p230 = scmp.eq.s32.totalorder %s27, 0
      %p231 = por %p229, %p230
      %p232 = scmp.ne.s32.totalorder %s218, %s219
      %p233 = scmp.eq.s32.totalorder %s28, 1
      %p234 = por %p232, %p233
      %p236 = scmp.ne.s32.totalorder %s219, %s235
      %p237 = scmp.eq.s32.totalorder %s28, 0
      %p238 = por %p236, %p237
      %p239 = scmp.le.s32.totalorder 1, %s22
      %p240 = scmp.lt.s32.totalorder %s22, 3
      %p241 = pnand %p239, %p240
      %p242 = pneg %p241
      // Predicated region
      $region9: #{tpu_custom_call.1} parent=5 // pred_check
        _
      $region10: #{tpu_custom_call.1} parent=5 // pred_check_branch
        %244 = sbr.rel (%p241) target = $region12
      $region11: #{tpu_custom_call.1} parent=5 // pred_region
        %s245 = ssub.s32 %s22, 1
        // Predicated region
        $region13: #{tpu_custom_call.1} parent=11 // pred_check
          %p246 = pneg %p69
        $region14: #{tpu_custom_call.1} parent=11 // pred_check_branch
          %248 = sbr.rel (%p246) target = $region16
        $region15: #{tpu_custom_call.1} parent=11 // pred_region
          _
        $region16: #{tpu_custom_call.1} parent=11 // pred_fallthru
          _
        // Predicated region
        $region17: #{tpu_custom_call.1} parent=11 // pred_check
          %p249 = pneg %p90
        $region18: #{tpu_custom_call.1} parent=11 // pred_check_branch
          %251 = sbr.rel (%p249) target = $region20
        $region19: #{tpu_custom_call.1} parent=11 // pred_region
          _
        $region20: #{tpu_custom_call.1} parent=11 // pred_fallthru
          _
        // Predicated region
        $region21: #{tpu_custom_call.1} parent=11 // pred_check
          %p252 = pneg %p111
        $region22: #{tpu_custom_call.1} parent=11 // pred_check_branch
          %254 = sbr.rel (%p252) target = $region24
        $region23: #{tpu_custom_call.1} parent=11 // pred_region
          _
        $region24: #{tpu_custom_call.1} parent=11 // pred_fallthru
          _
        // Predicated region
        $region25: #{tpu_custom_call.1} parent=11 // pred_check
          %p255 = pneg %p132
        $region26: #{tpu_custom_call.1} parent=11 // pred_check_branch
          %257 = sbr.rel (%p255) target = $region28
        $region27: #{tpu_custom_call.1} parent=11 // pred_region
          _
        $region28: #{tpu_custom_call.1} parent=11 // pred_fallthru
          _
        // Predicated region
        $region29: #{tpu_custom_call.1} parent=11 // pred_check
          %p258 = pneg %p153
        $region30: #{tpu_custom_call.1} parent=11 // pred_check_branch
          %260 = sbr.rel (%p258) target = $region32
        $region31: #{tpu_custom_call.1} parent=11 // pred_region
          %s262 = ssub.s32 512, 512
          %263 = vsyncadd [#allocation7], %s262
          %s264 = sshll.u32 [#allocation6], 4
          %s265 = int_to_ptr.vmem [resolvable:$true] %s264
          %270 = dma.hbm_to_vmem [thread:$0]  %s5, 512, %s265, [#allocation7], 256, 256, 16
        $region32: #{tpu_custom_call.1} parent=11 // pred_fallthru
          _
      $region12: #{tpu_custom_call.1} parent=5 // pred_fallthru
        _
      %p271 = scmp.lt.s32.totalorder %s22, 2
      // Predicated region
      $region33: #{tpu_custom_call.1} parent=5 // pred_check
        %p272 = pneg %p271
      $region34: #{tpu_custom_call.1} parent=5 // pred_check_branch
        %274 = sbr.rel (%p272) target = $region36
      $region35: #{tpu_custom_call.1} parent=5 // pred_region
        // Predicated region
        $region37: #{tpu_custom_call.1} parent=35 // pred_check
          %p275 = pneg %p42
        $region38: #{tpu_custom_call.1} parent=35 // pred_check_branch
          %277 = sbr.rel (%p275) target = $region40
        $region39: #{tpu_custom_call.1} parent=35 // pred_region
          %s278 = sand.u32 %s32, 1
          %s279 = scalar_lea.sflag [#allocation4], %s278
          %s280 = sand.u32 %s32, 1
          %s281 = smul.addr %s280, 8
          %s282 = scalar_lea.vmem [#allocation3], %s281
          %s284 = ssub.s32 128, 128
          %285 = vsyncadd %s279, %s284
          %s286 = smul.addr %s22, 2
          %s287 = smul.addr %s286, 64
          %s288 = scalar_lea.hbm %s0, %s287
          %s290 = sshll.u32 %s282, 4
          %s291 = int_to_ptr.vmem [resolvable:$true] %s290
          %293 = dma.hbm_to_vmem [thread:$0]  %s288, 128, %s291, %s279
        $region40: #{tpu_custom_call.1} parent=35 // pred_fallthru
          _
      $region36: #{tpu_custom_call.1} parent=5 // pred_fallthru
        _
      %p294 = scmp.le.s32.totalorder 1, %s22
      %p295 = scmp.lt.s32.totalorder %s22, 3
      %p296 = pnand %p294, %p295
      %p297 = pneg %p296
      // Predicated region
      $region41: #{tpu_custom_call.1} parent=5 // pred_check
        _
      $region42: #{tpu_custom_call.1} parent=5 // pred_check_branch
        %299 = sbr.rel (%p296) target = $region44
      $region43: #{tpu_custom_call.1} parent=5 // pred_region
        %s300 = ssub.s32 %s22, 1
        %s301 = sand.u32 %s35, 1
        %s302 = scalar_lea.sflag [#allocation4], %s301
        %s303 = sand.u32 %s35, 1
        %s304 = smul.addr %s303, 8
        %s305 = scalar_lea.vmem [#allocation3], %s304
        // Predicated region
        $region45: #{tpu_custom_call.1} parent=43 // pred_check
          %p306 = pneg %p48
        $region46: #{tpu_custom_call.1} parent=43 // pred_check_branch
          %308 = sbr.rel (%p306) target = $region48
        $region47: #{tpu_custom_call.1} parent=43 // pred_region
          %309 = dma.done %s302, 128
        $region48: #{tpu_custom_call.1} parent=43 // pred_fallthru
          _
        // Predicated region
        $region49: #{tpu_custom_call.1} parent=43 // pred_check
          %p310 = pneg %p153
        $region50: #{tpu_custom_call.1} parent=43 // pred_check_branch
          %312 = sbr.rel (%p310) target = $region52
        $region51: #{tpu_custom_call.1} parent=43 // pred_region
          %313 = dma.done [#allocation7], 512
        $region52: #{tpu_custom_call.1} parent=43 // pred_fallthru
          _
        %s314 = sand.u32 %s35, 1
        %s315 = scalar_lea.sflag [#allocation4], %s314
        %s316 = sand.u32 %s35, 1
        %s317 = smul.addr %s316, 8
        %s318 = scalar_lea.vmem [#allocation3], %s317
        %p319 = pneg %p48
        %p320 = pneg %p45
        %p321 = pneg %p69
        %p322 = pneg %p66
        %p323 = pneg %p90
        %p324 = pneg %p87
        %p325 = pneg %p111
        %p326 = pneg %p108
        %p327 = pneg %p132
        %p328 = pneg %p129
        %p329 = pneg %p153
        %p330 = pneg %p150
        %p331 = pneg %p179
        %p332 = pneg %p176
        %s333 = sand.u32 %s166, 1
        %s334 = scalar_lea.sflag [#allocation5], %s333
        %s335 = sand.u32 %s166, 1
        %s336 = smul.addr %s335, 16
        %s337 = scalar_lea.vmem [#allocation8], %s336
        %p338 = pneg %p205
        %p339 = pneg %p202
        %p340 = scmp.lt.s32.totalorder %s27, 1
        %s341 = scalar_select %p340, %s27, 1
        %s342 = smul.addr %s341, 4
        %s343 = scalar_lea.vmem %s7, %s342
        %p344 = pneg %p231
        %p345 = pneg %p228
        %p346 = scmp.lt.s32.totalorder %s27, 1
        %s347 = scalar_select %p346, %s27, 1
        %s348 = smul.addr %s347, 4
        %s349 = scalar_lea.vmem %s8, %s348
        %p350 = scmp.lt.s32.totalorder %s27, 1
        %s351 = scalar_select %p350, %s27, 1
        %s352 = smul.addr %s351, 4
        %s353 = scalar_lea.vmem %s7, %s352
        %p354 = scmp.lt.s32.totalorder %s27, 1
        %s355 = scalar_select %p354, %s27, 1
        %s356 = smul.addr %s355, 4
        %s357 = scalar_lea.vmem %s8, %s356
        %v358 = vld [vmem:[%s305] sm:$0xff]
        %v359 = vld [vmem:[%s1] sm:$0xf]
        %361 = vset.pattern.permute.xlu0 0
        %362 = vperm.xlu0 %361, %v359
        %v363 = vpop.permute.xlu0 %362
        %v365 = vunpack.c.l.s4 839922192
        %v366 = vunpack.c.0.s8 %v365
        %v367 = vlaneseq
        %v368 = vshrl.u32 %v367, 7
        %v369 = vsub.s32 %v366, %v368
        %v370 = vrot.slane %v363, %v369
        %v372 = vmul.f32 %v358, %v370
        %v373 = vld [vmem:[%s2] sm:$0xf]
        %375 = vset.pattern.permute.xlu0 0
        %376 = vperm.xlu0 %375, %v373
        %v377 = vpop.permute.xlu0 %376
        %v379 = vunpack.c.l.s4 839922192
        %v380 = vunpack.c.0.s8 %v379
        %v381 = vlaneseq
        %v382 = vshrl.u32 %v381, 7
        %v383 = vsub.s32 %v380, %v382
        %v384 = vrot.slane %v377, %v383
        %v386 = vadd.f32 %v372, %v384
        %v387 = vmax.f32 %v386, 0.0
        %v389 = vcombine.high %v387, %v387
        %391 = vrot.lane.b32.xlu0 %v387, 17
        %v392 = vpop.permute.xlu0 %391
        %393 = vrot.lane.b32.xlu0 %v389, 17
        %v394 = vpop.permute.xlu0 %393
        %v395 = vlaneseq
        %v396 = vand.u32 %v395, 127
        %vm397 = vcmp.lt.s32.totalorder %v396, 17
        %v398 = vsel %vm397, %v392, %v394
        %v399 = vsel %vm397, %v394, %v392
        %v400 = vld [vmem:[#allocation6] ss:$8 sm:$0x3]
        %v402 = vlaneseq
        %v403 = vshrl.u32 %v402, 7
        %v404 = vsub.s32 0, %v403
        %v405 = vrot.slane %v400, %v404
        %v406 = vlaneseq
        %v407 = vshrl.u32 %v406, 7
        %v408 = vsub.s32 1, %v407
        %v409 = vrot.slane %v400, %v408
        %v412 = vmul.f32 %v399, %v405
        %v413 = vmul.f32 %v398, %v409
        %414 = vst [vmem:[#allocation2] sm:$0xf] %v412
        %415 = vst [vmem:[#allocation2 + $0x8] sm:$0xf] %v413
        %416 = vrot.lane.b32.xlu0 %v387, 16
        %v417 = vpop.permute.xlu0 %416
        %418 = vrot.lane.b32.xlu0 %v389, 16
        %v419 = vpop.permute.xlu0 %418
        %vm420 = vcmp.lt.s32.totalorder %v396, 16
        %v421 = vsel %vm420, %v417, %v419
        %v422 = vsel %vm420, %v419, %v417
        %s423 = scalar_lea.vmem [#allocation6], 1
        %v424 = vld [vmem:[%s423] ss:$8 sm:$0x3]
        %v426 = vlaneseq
        %v427 = vshrl.u32 %v426, 7
        %v428 = vsub.s32 0, %v427
        %v429 = vrot.slane %v424, %v428
        %v430 = vlaneseq
        %v431 = vshrl.u32 %v430, 7
        %v432 = vsub.s32 1, %v431
        %v433 = vrot.slane %v424, %v432
        %v436 = vmul.f32 %v422, %v429
        %v437 = vmul.f32 %v421, %v433
        %v440 = vrot.slane %v436, 4
        %v441 = vrot.slane %v437, 4
        %444 = vst [vmem:[#allocation2] sm:$0xf0] %v440
        %445 = vst [vmem:[#allocation2 + $0x8] sm:$0xf0] %v441
        %446 = vrot.lane.b32.xlu0 %v387, 15
        %v447 = vpop.permute.xlu0 %446
        %448 = vrot.lane.b32.xlu0 %v389, 15
        %v449 = vpop.permute.xlu0 %448
        %vm450 = vcmp.lt.s32.totalorder %v396, 15
        %v451 = vsel %vm450, %v447, %v449
        %v452 = vsel %vm450, %v449, %v447
        %s453 = scalar_lea.vmem [#allocation6], 2
        %v454 = vld [vmem:[%s453] ss:$8 sm:$0x3]
        %v456 = vlaneseq
        %v457 = vshrl.u32 %v456, 7
        %v458 = vsub.s32 0, %v457
        %v459 = vrot.slane %v454, %v458
        %v460 = vlaneseq
        %v461 = vshrl.u32 %v460, 7
        %v462 = vsub.s32 1, %v461
        %v463 = vrot.slane %v454, %v462
        %v466 = vmul.f32 %v452, %v459
        %v467 = vmul.f32 %v451, %v463
        %468 = vst [vmem:[#allocation2 + $0x10] sm:$0xf] %v466
        %469 = vst [vmem:[#allocation2 + $0x18] sm:$0xf] %v467
        %470 = vrot.lane.b32.xlu0 %v387, 1
        %v471 = vpop.permute.xlu0 %470
        %472 = vrot.lane.b32.xlu0 %v389, 1
        %v473 = vpop.permute.xlu0 %472
        %vm474 = vcmp.lt.s32.totalorder %v396, 1
        %v475 = vsel %vm474, %v471, %v473
        %v476 = vsel %vm474, %v473, %v471
        %s477 = scalar_lea.vmem [#allocation6], 3
        %v478 = vld [vmem:[%s477] ss:$8 sm:$0x3]
        %v480 = vlaneseq
        %v481 = vshrl.u32 %v480, 7
        %v482 = vsub.s32 0, %v481
        %v483 = vrot.slane %v478, %v482
        %v484 = vlaneseq
        %v485 = vshrl.u32 %v484, 7
        %v486 = vsub.s32 1, %v485
        %v487 = vrot.slane %v478, %v486
        %v490 = vmul.f32 %v476, %v483
        %v491 = vmul.f32 %v475, %v487
        %v494 = vrot.slane %v490, 4
        %v495 = vrot.slane %v491, 4
        %498 = vst [vmem:[#allocation2 + $0x10] sm:$0xf0] %v494
        %499 = vst [vmem:[#allocation2 + $0x18] sm:$0xf0] %v495
        %500 = vst [vmem:[#allocation2 + $0x20] sm:$0xf] %v387
        %501 = vst [vmem:[#allocation2 + $0x28] sm:$0xf] %v389
        %502 = vrot.lane.b32.xlu0 %v387, 127
        %v503 = vpop.permute.xlu0 %502
        %504 = vrot.lane.b32.xlu0 %v389, 127
        %v505 = vpop.permute.xlu0 %504
        %vm506 = vcmp.lt.s32.totalorder %v396, 127
        %v507 = vsel %vm506, %v503, %v505
        %v508 = vsel %vm506, %v505, %v503
        %s509 = scalar_lea.vmem [#allocation6], 5
        %v510 = vld [vmem:[%s509] ss:$8 sm:$0x3]
        %v512 = vlaneseq
        %v513 = vshrl.u32 %v512, 7
        %v514 = vsub.s32 0, %v513
        %v515 = vrot.slane %v510, %v514
        %v516 = vlaneseq
        %v517 = vshrl.u32 %v516, 7
        %v518 = vsub.s32 1, %v517
        %v519 = vrot.slane %v510, %v518
        %v522 = vmul.f32 %v507, %v515
        %v523 = vmul.f32 %v508, %v519
        %v526 = vrot.slane %v522, 4
        %v527 = vrot.slane %v523, 4
        %530 = vst [vmem:[#allocation2 + $0x20] sm:$0xf0] %v526
        %531 = vst [vmem:[#allocation2 + $0x28] sm:$0xf0] %v527
        %532 = vrot.lane.b32.xlu0 %v387, 113
        %v533 = vpop.permute.xlu0 %532
        %534 = vrot.lane.b32.xlu0 %v389, 113
        %v535 = vpop.permute.xlu0 %534
        %vm536 = vcmp.lt.s32.totalorder %v396, 113
        %v537 = vsel %vm536, %v533, %v535
        %v538 = vsel %vm536, %v535, %v533
        %s539 = scalar_lea.vmem [#allocation6], 6
        %v540 = vld [vmem:[%s539] ss:$8 sm:$0x3]
        %v542 = vlaneseq
        %v543 = vshrl.u32 %v542, 7
        %v544 = vsub.s32 0, %v543
        %v545 = vrot.slane %v540, %v544
        %v546 = vlaneseq
        %v547 = vshrl.u32 %v546, 7
        %v548 = vsub.s32 1, %v547
        %v549 = vrot.slane %v540, %v548
        %v552 = vmul.f32 %v537, %v545
        %v553 = vmul.f32 %v538, %v549
        %554 = vst [vmem:[#allocation2 + $0x30] sm:$0xf] %v552
        %555 = vst [vmem:[#allocation2 + $0x38] sm:$0xf] %v553
        %556 = vrot.lane.b32.xlu0 %v387, 112
        %v557 = vpop.permute.xlu0 %556
        %558 = vrot.lane.b32.xlu0 %v389, 112
        %v559 = vpop.permute.xlu0 %558
        %vm560 = vcmp.lt.s32.totalorder %v396, 112
        %v561 = vsel %vm560, %v557, %v559
        %v562 = vsel %vm560, %v559, %v557
        %s563 = scalar_lea.vmem [#allocation6], 7
        %v564 = vld [vmem:[%s563] ss:$8 sm:$0x3]
        %v566 = vlaneseq
        %v567 = vshrl.u32 %v566, 7
        %v568 = vsub.s32 0, %v567
        %v569 = vrot.slane %v564, %v568
        %v570 = vlaneseq
        %v571 = vshrl.u32 %v570, 7
        %v572 = vsub.s32 1, %v571
        %v573 = vrot.slane %v564, %v572
        %v576 = vmul.f32 %v561, %v569
        %v577 = vmul.f32 %v562, %v573
        %v580 = vrot.slane %v576, 4
        %v581 = vrot.slane %v577, 4
        %584 = vst [vmem:[#allocation2 + $0x30] sm:$0xf0] %v580
        %585 = vst [vmem:[#allocation2 + $0x38] sm:$0xf0] %v581
        %586 = vrot.lane.b32.xlu0 %v387, 111
        %v587 = vpop.permute.xlu0 %586
        %588 = vrot.lane.b32.xlu0 %v389, 111
        %v589 = vpop.permute.xlu0 %588
        %vm590 = vcmp.lt.s32.totalorder %v396, 111
        %v591 = vsel %vm590, %v587, %v589
        %v592 = vsel %vm590, %v589, %v587
        %s593 = scalar_lea.vmem [#allocation6], 16
        %v594 = vld [vmem:[%s593] ss:$8 sm:$0x3]
        %v596 = vlaneseq
        %v597 = vshrl.u32 %v596, 7
        %v598 = vsub.s32 0, %v597
        %v599 = vrot.slane %v594, %v598
        %v600 = vlaneseq
        %v601 = vshrl.u32 %v600, 7
        %v602 = vsub.s32 1, %v601
        %v603 = vrot.slane %v594, %v602
        %v606 = vmul.f32 %v591, %v599
        %v607 = vmul.f32 %v592, %v603
        %608 = vst [vmem:[#allocation2 + $0x40] sm:$0xf] %v606
        %609 = vst [vmem:[#allocation2 + $0x48] sm:$0xf] %v607
        %v610 = vld [vmem:[%s3] sm:$0xf]
        %v611 = vld [vmem:[#allocation2] sm:$0xff]
        %v612 = vld [vmem:[#allocation2 + $0x8] sm:$0xff]
        %v613 = vld [vmem:[#allocation2 + $0x10] sm:$0xff]
        %v614 = vld [vmem:[#allocation2 + $0x18] sm:$0xff]
        %v615 = vld [vmem:[#allocation2 + $0x20] sm:$0xff]
        %v616 = vld [vmem:[#allocation2 + $0x28] sm:$0xff]
        %v617 = vld [vmem:[#allocation2 + $0x30] sm:$0xff]
        %v618 = vld [vmem:[#allocation2 + $0x38] sm:$0xff]
        %v619 = vld [vmem:[#allocation2 + $0x40] sm:$0xf]
        %v620 = vld [vmem:[#allocation2 + $0x48] sm:$0xf]
        %v621 = vld [vmem:[%s4] sm:$0xf]
        %623 = vset.pattern.permute.xlu0 0
        %624 = vperm.xlu0 %623, %v621
        %v625 = vpop.permute.xlu0 %624
        %vm627 = vcmask 293888
        %v629 = vsel %vm627, %v610, 0
        %vm631 = vcmask 1043456
        %v633 = vsel %vm631, %v619, 0
        %v636 = vsel %vm631, %v620, 0
        %638 = vmatprep.subr.mxu0 0.0
        %639 = vmatpush1.msra.mxu0 0.0
        %640 = vmatprep.subr.mxu0 0.0
        %641 = vmatpush1.msra.mxu0 0.0
        %642 = vmatprep.subr.mxu0 0.0
        %643 = vmatpush1.msra.mxu0 0.0
        %644 = vmatprep.subr.mxu0 0.0
        %645 = vmatpush1.msra.mxu0 0.0
        %646 = vmatprep.subr.mxu0 0.0
        %647 = vmatpush1.msra.mxu0 0.0
        %648 = vmatprep.subr.mxu0 0.0
        %649 = vmatpush1.msra.mxu0 0.0
        %650 = vmatprep.subr.mxu0 0.0
        %651 = vmatpush1.msra.mxu0 0.0
        %652 = vmatprep.subr.mxu0 0.0
        %653 = vmatpush1.msra.mxu0 0.0
        %654 = vmatprep.subr.mxu0 0.0
        %655 = vmatpush1.msra.mxu0 0.0
        %656 = vmatprep.subr.mxu0 0.0
        %657 = vmatpush1.msra.mxu0 0.0
        %658 = vmatprep.subr.mxu0 0.0
        %659 = vmatpush1.msra.mxu0 0.0
        %660 = vmatprep.subr.mxu0 %v636
        %661 = vmatpush1.msra.mxu0 %v633
        %662 = vmatprep.subr.mxu0 %v618
        %663 = vmatpush1.msra.mxu0 %v617
        %664 = vmatprep.subr.mxu0 %v616
        %665 = vmatpush1.msra.mxu0 %v615
        %666 = vmatprep.subr.mxu0 %v614
        %667 = vmatpush1.msra.mxu0 %v613
        %668 = vmatprep.subr.mxu0 %v612
        %669 = vmatpush1.msra.mxu0 %v611
        %670 = vmatprep.subr.mxu0 0.0
        %671 = vmatpush2.msra.mxu0 0.0
        %672 = vmatprep.subr.mxu0 0.0
        %673 = vmatpush2.msra.mxu0 0.0
        %674 = vmatprep.subr.mxu0 0.0
        %675 = vmatpush2.msra.mxu0 0.0
        %676 = vmatprep.subr.mxu0 0.0
        %677 = vmatpush2.msra.mxu0 0.0
        %678 = vmatprep.subr.mxu0 0.0
        %679 = vmatpush2.msra.mxu0 0.0
        %680 = vmatprep.subr.mxu0 0.0
        %681 = vmatpush2.msra.mxu0 0.0
        %682 = vmatprep.subr.mxu0 0.0
        %683 = vmatpush2.msra.mxu0 0.0
        %684 = vmatprep.subr.mxu0 0.0
        %685 = vmatpush2.msra.mxu0 0.0
        %686 = vmatprep.subr.mxu0 0.0
        %687 = vmatpush2.msra.mxu0 0.0
        %688 = vmatprep.subr.mxu0 0.0
        %689 = vmatpush2.msra.mxu0 0.0
        %690 = vmatprep.subr.mxu0 0.0
        %691 = vmatpush2.msra.mxu0 0.0
        %692 = vmatprep.subr.mxu0 0.0
        %693 = vmatpush2.msra.mxu0 0.0
        %694 = vmatprep.subr.mxu0 0.0
        %695 = vmatpush2.msra.mxu0 0.0
        %696 = vmatprep.subr.mxu0 0.0
        %697 = vmatpush2.msra.mxu0 0.0
        %698 = vmatprep.subr.mxu0 0.0
        %699 = vmatpush2.msra.mxu0 0.0
        %700 = vmatprep.subr.mxu0 0.0
        %701 = vmatpush2.msra.mxu0 0.0
        %702 = vmatprep.mubr.f32.mxu0 0.0
        %703 = vmatmul.mubr.f32.gmra.mxu0 %v629
        %v704 = vpop.f32.mrf.mxu0
        %v705 = vadd.f32 %v625, %v704
        %v706 = vpop.f32.mrf.mxu0
        %v707 = vadd.f32 %v625, %v706
        %708 = vdwg.mxu0
        %v710 = vcombine.high %v358, %v358
        %712 = vst [vmem:[%s337] sm:$0xf] %v358
        %713 = vst [vmem:[%s337 + $0x8] sm:$0xf] %v710
        %v716 = vrot.slane %v705, 4
        %v717 = vrot.slane %v707, 4
        %720 = vst [vmem:[%s337] sm:$0xf0] %v716
        %721 = vst [vmem:[%s337 + $0x8] sm:$0xf0] %v717
        %v722 = vsel %vm631, %v705, 0.0
        %v723 = vsel %vm631, %v707, 0.0
        %v724 = vadd.f32 %v722, %v723
        %725 = vadd.xlane.f32.xlu0 %v724
        %v726 = vpop.xlane.xlu0 %725
        %vm727 = vcmask 3072
        %728 = vst.msk [vmem:[%s353] sm:$0xf] %vm727, %v726
        %v729 = vmul.f32 %v705, %v705
        %v730 = vmul.f32 %v707, %v707
        %v731 = vsel %vm631, %v729, 0.0
        %v732 = vsel %vm631, %v730, 0.0
        %v733 = vadd.f32 %v731, %v732
        %734 = vadd.xlane.f32.xlu0 %v733
        %v735 = vpop.xlane.xlu0 %734
        %736 = vst.msk [vmem:[%s357] sm:$0xf] %vm727, %v735
        %s737 = sand.u32 %s166, 1
        %s738 = scalar_lea.sflag [#allocation5], %s737
        %s739 = sand.u32 %s166, 1
        %s740 = smul.addr %s739, 16
        %s741 = scalar_lea.vmem [#allocation8], %s740
        %p742 = scmp.lt.s32.totalorder %s27, 1
        %s743 = scalar_select %p742, %s27, 1
        %s744 = smul.addr %s743, 4
        %s745 = scalar_lea.vmem %s7, %s744
        %p746 = scmp.lt.s32.totalorder %s27, 1
        %s747 = scalar_select %p746, %s27, 1
        %s748 = smul.addr %s747, 4
        %s749 = scalar_lea.vmem %s8, %s748
        // Predicated region
        $region53: #{tpu_custom_call.1} parent=43 // pred_check
          %p750 = pneg %p176
        $region54: #{tpu_custom_call.1} parent=43 // pred_check_branch
          %752 = sbr.rel (%p750) target = $region56
        $region55: #{tpu_custom_call.1} parent=43 // pred_region
          %s754 = ssub.s32 256, 256
          %755 = vsyncadd %s738, %s754
          %s756 = smul.addr %s27, 2
          %s757 = smul.addr %s756, 128
          %s758 = scalar_lea.hbm %s6, %s757
          %s760 = sshll.u32 %s741, 4
          %s761 = int_to_ptr.vmem [resolvable:$true] %s760
          %763 = dma.vmem_to_hbm [thread:$0]  %s761, 256, %s758, %s738
        $region56: #{tpu_custom_call.1} parent=43 // pred_fallthru
          _
        // Predicated region
        $region57: #{tpu_custom_call.1} parent=43 // pred_check
          %p764 = pneg %p202
        $region58: #{tpu_custom_call.1} parent=43 // pred_check_branch
          %766 = sbr.rel (%p764) target = $region60
        $region59: #{tpu_custom_call.1} parent=43 // pred_region
          _
        $region60: #{tpu_custom_call.1} parent=43 // pred_fallthru
          _
        // Predicated region
        $region61: #{tpu_custom_call.1} parent=43 // pred_check
          %p767 = pneg %p228
        $region62: #{tpu_custom_call.1} parent=43 // pred_check_branch
          %769 = sbr.rel (%p767) target = $region64
        $region63: #{tpu_custom_call.1} parent=43 // pred_region
          _
        $region64: #{tpu_custom_call.1} parent=43 // pred_fallthru
          _
      $region44: #{tpu_custom_call.1} parent=5 // pred_fallthru
        _
      %p770 = scmp.le.s32.totalorder 2, %s22
      // Predicated region
      $region65: #{tpu_custom_call.1} parent=5 // pred_check
        %p771 = pneg %p770
      $region66: #{tpu_custom_call.1} parent=5 // pred_check_branch
        %773 = sbr.rel (%p771) target = $region68
      $region67: #{tpu_custom_call.1} parent=5 // pred_region
        %s774 = ssub.s32 %s22, 2
        // Predicated region
        $region69: #{tpu_custom_call.1} parent=67 // pred_check
          %p775 = pneg %p182
        $region70: #{tpu_custom_call.1} parent=67 // pred_check_branch
          %777 = sbr.rel (%p775) target = $region72
        $region71: #{tpu_custom_call.1} parent=67 // pred_region
          %s778 = sand.u32 %s167, 1
          %s779 = scalar_lea.sflag [#allocation5], %s778
          %s780 = sand.u32 %s167, 1
          %s781 = smul.addr %s780, 16
          %s782 = scalar_lea.vmem [#allocation8], %s781
          %783 = dma.done %s779, 256
        $region72: #{tpu_custom_call.1} parent=67 // pred_fallthru
          _
        // Predicated region
        $region73: #{tpu_custom_call.1} parent=67 // pred_check
          %p784 = pneg %p208
        $region74: #{tpu_custom_call.1} parent=67 // pred_check_branch
          %786 = sbr.rel (%p784) target = $region76
        $region75: #{tpu_custom_call.1} parent=67 // pred_region
          %p787 = scmp.lt.s32.totalorder %s28, 1
          %s788 = scalar_select %p787, %s28, 1
          %s789 = smul.addr %s788, 4
          %s790 = scalar_lea.vmem %s7, %s789
        $region76: #{tpu_custom_call.1} parent=67 // pred_fallthru
          _
        // Predicated region
        $region77: #{tpu_custom_call.1} parent=67 // pred_check
          %p791 = pneg %p234
        $region78: #{tpu_custom_call.1} parent=67 // pred_check_branch
          %793 = sbr.rel (%p791) target = $region80
        $region79: #{tpu_custom_call.1} parent=67 // pred_region
          %p794 = scmp.lt.s32.totalorder %s28, 1
          %s795 = scalar_select %p794, %s28, 1
          %s796 = smul.addr %s795, 4
          %s797 = scalar_lea.vmem %s8, %s796
        $region80: #{tpu_custom_call.1} parent=67 // pred_fallthru
          _
      $region68: #{tpu_custom_call.1} parent=5 // pred_fallthru
        _
    $region6: #{tpu_custom_call.1} parent=1 // loop_footer
      %s26 = sadd.s32 1, %s22
    $region7: #{tpu_custom_call.1} parent=1 // loop_footer_branch
      %21 = sbr.rel target = $region3
    $region8: #{tpu_custom_call.1} parent=1 // loop_exit
      _
    %798 = vsyncpa [#allocation4], 1
    %s799 = scalar_lea.sflag [#allocation4], 1
    %800 = vsyncpa %s799, 1
    %801 = vsyncpa [#allocation7], 1
    %802 = vsyncpa [#allocation5], 1
    %s803 = scalar_lea.sflag [#allocation5], 1
    %804 = vsyncpa %s803, 1

</llo_original>
